<compile_context>
chip_gen: v7x
topology: tpu7x:2x2x1
jax: 0.10.0
libtpu: 0.0.40
codegen_flags: <defaults>
</compile_context>

<pallas_src>
import functools
import math

import jax
import jax.numpy as jnp
from jax.experimental import pallas as pl
from jax.experimental.pallas import tpu as pltpu


def make_pe_table(max_len, d_model, dtype=jnp.float32):
    """Build the (max_len, d_model) sinusoidal PE buffer, same as __init__."""
    position = jnp.arange(max_len, dtype=jnp.float32)[:, None]              # (L, 1)
    div_term = jnp.exp(
        jnp.arange(0, d_model, 2, dtype=jnp.float32)
        * -(math.log(10000.0) / d_model)
    )                                                                        # (ceil(D/2),)
    angles = position * div_term                                             # (L, ceil(D/2))
    pe = jnp.zeros((max_len, d_model), dtype=jnp.float32)
    pe = pe.at[:, 0::2].set(jnp.sin(angles))
    pe = pe.at[:, 1::2].set(jnp.cos(angles)[:, : d_model // 2])              # odd-D safe
    return pe.astype(dtype)


# ----------------------------- kernels -------------------------------------


def _pe_add_kernel(x_ref, pe_ref, o_ref):
    # x_ref and pe_ref tiles have broadcast-compatible shapes.
    o_ref[...] = (x_ref[...] + pe_ref[...]).astype(o_ref.dtype)


def _pe_add_dropout_kernel(x_ref, pe_ref, keep_ref, o_ref, *, inv_keep):
    # Inverted dropout: keep_ref holds 0/1 in x's dtype; kept values scaled.
    y = (x_ref[...] + pe_ref[...]) * (keep_ref[...] * inv_keep)
    o_ref[...] = y.astype(o_ref.dtype)


# ----------------------------- tiling helpers -------------------------------


def _pick_tile(total, quantum, max_tile):
    """Largest multiple of `quantum` that divides `total` and is <= max(quantum, max_tile).

    Returns None if `total` is not itself a multiple of `quantum` (caller falls
    back to a full-extent block).
    """
    if total % quantum != 0:
        return None
    t = min(total, max(quantum, (max_tile // quantum) * quantum))
    t -= t % quantum
    while total % t != 0:
        t -= quantum
    return t


# Per-step VMEM budget: double-buffered x/out(/mask) + PE tile.  Kept well
# under the scoped-VMEM defaults of v5e/v6e (16/32 MiB) and v7x (32 of 64 MiB),
# so no vmem_limit_bytes override is needed and double-buffering stays alive.
_VMEM_BUDGET_BYTES = 12 * 1024 * 1024


# ----------------------------- wrapper --------------------------------------


def positional_encoding(x, pe_table, *, dropout_p=0.1, training=False,
                        rng_key=None, vmem_budget_bytes=_VMEM_BUDGET_BYTES):
    """Apply x + pe[:S] followed by dropout (identity when training=False)."""
    B, S, D = x.shape
    max_len = pe_table.shape[0]
    dtype = x.dtype
    itemsize = jnp.dtype(dtype).itemsize

    # Match PE dtype to x: avoids upcasting the add and halves PE DMA bytes
    # when activations are bf16 (no-op when dtypes already match).
    pe_table = pe_table.astype(dtype)

    use_dropout = bool(training) and float(dropout_p) > 0.0
    if use_dropout:
        if rng_key is None:
            rng_key = jax.random.PRNGKey(0)
        # TODO(synk): on real TPU hardware the mask could be drawn in-kernel
        # with pltpu.prng_random_bits to avoid this extra HBM read; the
        # stateful TPU PRNG has no CPU/interpret lowering, so build it here.
        keep = jax.random.bernoulli(rng_key, 1.0 - float(dropout_p), x.shape)
        keep = keep.astype(dtype)
        inv_keep = 1.0 / (1.0 - float(dropout_p))
        kernel = functools.partial(_pe_add_dropout_kernel, inv_keep=inv_keep)
        n_io = 3   # x, keep, out tiles (each double-buffered by the pipeline)
    else:
        keep = None
        kernel = _pe_add_kernel
        n_io = 2   # x, out tiles

    if D % 128 == 0:
        # ---- already lane-dense: keep (B, S, D), tile the sequence axis ----
        bytes_per_row = 2 * (n_io + 1) * D * itemsize
        max_rows = max(1, vmem_budget_bytes // bytes_per_row)
        tile_s = _pick_tile(S, 8, max_rows)
        if tile_s is None:
            # S not a multiple of 8: single full-S block; slice PE so the
            # block shape equals the full array dims.
            tile_s = S
            pe_in = pe_table[:S]
        else:
            # Full table passed un-sliced; BlockSpec selects rows [0, S).
            pe_in = pe_table

        grid = (S // tile_s, B)          # S outermost: each PE tile DMA'd once
        x_spec = pl.BlockSpec((None, tile_s, D), lambda s, b: (b, s, 0))
        pe_spec = pl.BlockSpec((tile_s, D), lambda s, b: (s, 0))
        in_specs = [x_spec, pe_spec] + ([x_spec] if use_dropout else [])
        operands = (x, pe_in) + ((keep,) if use_dropout else ())

        return pl.pallas_call(
            kernel,
            out_shape=jax.ShapeDtypeStruct((B, S, D), dtype),
            grid=grid,
            in_specs=in_specs,
            out_specs=x_spec,
            compiler_params=pltpu.CompilerParams(
                dimension_semantics=("parallel", "parallel")),
        )(*operands)

    # ---- D not a multiple of 128: flatten (S, D) into the lane axis --------
    SD = S * D
    x2 = x.reshape(B, SD)
    bytes_per_col = 2 * (n_io * B + 1) * itemsize
    max_cols = max(1, vmem_budget_bytes // bytes_per_col)
    tile_c = _pick_tile(SD, 128, max_cols)
    if tile_c is None:
        # S*D not a multiple of 128: one full-extent block (still correct).
        tile_c = SD
        pe_in = pe_table[:S].reshape(1, SD)
    else:
        # Free reshape of the full table; BlockSpec selects columns [0, S*D).
        pe_in = pe_table.reshape(1, max_len * D)

    grid = (SD // tile_c,)
    x_spec = pl.BlockSpec((B, tile_c), lambda c: (0, c))
    pe_spec = pl.BlockSpec((1, tile_c), lambda c: (0, c))
    in_specs = [x_spec, pe_spec] + ([x_spec] if use_dropout else [])
    operands = (x2, pe_in) + ((keep.reshape(B, SD),) if use_dropout else ())

    out2 = pl.pallas_call(
        kernel,
        out_shape=jax.ShapeDtypeStruct((B, SD), dtype),
        grid=grid,
        in_specs=in_specs,
        out_specs=x_spec,
        compiler_params=pltpu.CompilerParams(
            dimension_semantics=("parallel",)),
    )(*operands)
    return out2.reshape(B, S, D)


# ----------------------------- test ------------------------------------------


if __name__ == "__main__":
    B, S, D = 2, 8, 32
    max_len = 64          # small max_len for the synthetic test (module default 5000)
    dropout_p = 0.1

    root = jax.random.PRNGKey(0)
    x_key, drop_key = jax.random.split(root)
    x = jax.random.normal(x_key, (B, S, D), dtype=jnp.float32)

    pe_table = make_pe_table(max_len, D, dtype=x.dtype)

    # Eval-mode forward (dropout is identity), matches PyTorch module.eval().
    out = positional_encoding(x, pe_table, dropout_p=dropout_p, training=False)
    out = jax.block_until_ready(out)
    ref = x + pe_table[:S][None, :, :]
    assert out.shape == (B, S, D)
    assert jnp.allclose(out, ref, atol=1e-6, rtol=1e-6), "eval mismatch vs reference"

    # Training-mode forward (inverted dropout with an explicit keep-mask).
    out_train = positional_encoding(
        x, pe_table, dropout_p=dropout_p, training=True, rng_key=drop_key)
    out_train = jax.block_until_ready(out_train)
    keep = jax.random.bernoulli(drop_key, 1.0 - dropout_p, x.shape)
    ref_train = jnp.where(keep, ref * (1.0 / (1.0 - dropout_p)), 0.0)
    assert jnp.allclose(out_train, ref_train, atol=1e-5, rtol=1e-5), \
        "train mismatch vs reference"

    print("KERNEL_OK")
</pallas_src>

<mosaic_0001>
module attributes {stable_mosaic.version = 11 : i64} {
  func.func @_pe_add_kernel(%arg0: i32, %arg1: memref<2x256xf32, #tpu.memory_space<vmem>>, %arg2: memref<1x256xf32, #tpu.memory_space<vmem>>, %arg3: memref<2x256xf32, #tpu.memory_space<vmem>>) attributes {dimension_semantics = [#tpu.dimension_semantics<parallel>], iteration_bounds = array<i64: 1>, scalar_prefetch = 0 : i64, scratch_operands = 0 : i64, tpu.core_type = #tpu.core_type<tc>, window_params = [{transform_indices = @transform_0, window_bounds = array<i64: 2, 256>}, {transform_indices = @transform_1, window_bounds = array<i64: 1, 256>}, {transform_indices = @transform_2, window_bounds = array<i64: 2, 256>}]} {
    %c0 = arith.constant 0 : index
    %c0_0 = arith.constant 0 : index
    %0 = vector.load %arg1[%c0, %c0_0] : memref<2x256xf32, #tpu.memory_space<vmem>>, vector<2x256xf32>
    %c0_1 = arith.constant 0 : index
    %c0_2 = arith.constant 0 : index
    %1 = vector.load %arg2[%c0_1, %c0_2] : memref<1x256xf32, #tpu.memory_space<vmem>>, vector<1x256xf32>
    %2 = vector.broadcast %1 : vector<1x256xf32> to vector<2x256xf32>
    %3 = arith.addf %0, %2 : vector<2x256xf32>
    %c0_3 = arith.constant 0 : index
    %c0_4 = arith.constant 0 : index
    %4 = vector.load %arg3[%c0_3, %c0_4] : memref<2x256xf32, #tpu.memory_space<vmem>>, vector<2x256xf32>
    tpu.vector_store %arg3[%c0_3, %c0_4], %3 {strides = array<i32>} : memref<2x256xf32, #tpu.memory_space<vmem>>, vector<2x256xf32>,
    return
  }
  func.func @transform_0(%arg0: i32) -> (i32, i32) {
    %c0_i32 = arith.constant 0 : i32
    %c0_i32_0 = arith.constant 0 : i32
    return %c0_i32, %arg0 : i32, i32
  }
  func.func @transform_1(%arg0: i32) -> (i32, i32) {
    %c0_i32 = arith.constant 0 : i32
    %c0_i32_0 = arith.constant 0 : i32
    return %c0_i32, %arg0 : i32, i32
  }
  func.func @transform_2(%arg0: i32) -> (i32, i32) {
    %c0_i32 = arith.constant 0 : i32
    %c0_i32_0 = arith.constant 0 : i32
    return %c0_i32, %arg0 : i32, i32
  }
}

</mosaic_0001>

<llo_original>
// kernel: tpu_custom_call.1
$region0: #{tpu_custom_call.1}
  #allocation0 [shape = 'u32[]', space=smem, size = 0x4, offset = 0x4, fixed_abs, tag = 'smem constant byte address 0x4 - core index']
  #allocation1 [shape = 'u32[144,128]{1,0:T(1,128)}', space=vmem, size = 0x12000, scoped, tag = 'internal scratch']
  %s0 = inlined_call_operand.hbm [shape: f32[2,256], index: 0, kind: input, shape index: {}]
  %s1 = inlined_call_operand.hbm [shape: f32[1,2048], index: 1, kind: input, shape index: {}]
  %s2 = inlined_call_operand.hbm [shape: f32[2,256], index: 2, kind: output, shape index: {}]
  %s3 = sld [smem:[#allocation0]]
  $region26: #{tpu_custom_call.1} parent=0
    _
  %s5 = ssub.s32 1, %s3
  %s6 = scalar_select 0, %s5, %s3
  $region1: #{tpu_custom_call.1} parent=0
    #allocation2 [shape = 'u8[2048]{0}', space=vmem, size = 0x800, scoped, tag = 'input window, operand 0, single buffered']
    #allocation3 [shape = 's32[1]{0}', space=sflag, size = 0x4, scoped, tag = 'scoped memory for tpu_custom_call.1']
    #allocation4 [shape = 's32[1]{0}', space=sflag, size = 0x4, scoped, tag = 'scoped memory for tpu_custom_call.1']
    #allocation5 [shape = 'u8[1024]{0}', space=vmem, size = 0x400, scoped, tag = 'input window, operand 1, single buffered']
    #allocation6 [shape = 's32[1]{0}', space=sflag, size = 0x4, scoped, tag = 'scoped memory for tpu_custom_call.1']
    #allocation7 [shape = 'u8[2048]{0}', space=vmem, size = 0x800, scoped, tag = 'output window, operand 0, single buffered']
    %7 = vsyncpa [#allocation3], 0
    %8 = vsyncpa [#allocation6], 0
    %9 = vsyncpa [#allocation4], 0
    // Predicated region
    $region2: #{tpu_custom_call.1} parent=1 // pred_check
      _
    $region3: #{tpu_custom_call.1} parent=1 // pred_check_branch
      %11 = sbr.rel (0) target = $region5
    $region4: #{tpu_custom_call.1} parent=1 // pred_region
      %s13 = ssub.s32 64, 64
      %14 = vsyncadd [#allocation3], %s13
      %s16 = sshll.u32 [#allocation2], 4
      %s17 = int_to_ptr.vmem [resolvable:$true] %s16
      %19 = dma.hbm_to_vmem [thread:$0]  %s0, 64, %s17, [#allocation3]
    $region5: #{tpu_custom_call.1} parent=1 // pred_fallthru
      _
    // Predicated region
    $region6: #{tpu_custom_call.1} parent=1 // pred_check
      _
    $region7: #{tpu_custom_call.1} parent=1 // pred_check_branch
      %21 = sbr.rel (0) target = $region9
    $region8: #{tpu_custom_call.1} parent=1 // pred_region
      %s23 = ssub.s32 32, 32
      %24 = vsyncadd [#allocation6], %s23
      %s26 = sshll.u32 [#allocation5], 4
      %s27 = int_to_ptr.vmem [resolvable:$true] %s26
      %29 = dma.hbm_to_vmem [thread:$0]  %s1, 32, %s27, [#allocation6]
    $region9: #{tpu_custom_call.1} parent=1 // pred_fallthru
      _
    // Predicated region
    $region10: #{tpu_custom_call.1} parent=1 // pred_check
      _
    $region11: #{tpu_custom_call.1} parent=1 // pred_check_branch
      %31 = sbr.rel (0) target = $region13
    $region12: #{tpu_custom_call.1} parent=1 // pred_region
      %32 = dma.done [#allocation3], 64
    $region13: #{tpu_custom_call.1} parent=1 // pred_fallthru
      _
    // Predicated region
    $region14: #{tpu_custom_call.1} parent=1 // pred_check
      _
    $region15: #{tpu_custom_call.1} parent=1 // pred_check_branch
      %34 = sbr.rel (0) target = $region17
    $region16: #{tpu_custom_call.1} parent=1 // pred_region
      %35 = dma.done [#allocation6], 32
    $region17: #{tpu_custom_call.1} parent=1 // pred_fallthru
      _
    %v36 = vld [vmem:[#allocation2] sm:$0xf]
    %v37 = vld [vmem:[#allocation5] sm:$0x3]
    %v39 = vlaneseq
    %v40 = vshrl.u32 %v39, 7
    %v41 = vsub.s32 0, %v40
    %v42 = vrot.slane %v37, %v41
    %v43 = vlaneseq
    %v44 = vshrl.u32 %v43, 7
    %v45 = vsub.s32 1, %v44
    %v46 = vrot.slane %v37, %v45
    %v47 = vcombine.low %v42, %v46
    %v49 = vunpack.c.l.s4 1983009808
    %v50 = vunpack.c.0.s8 %v49
    %v51 = vlaneseq
    %v52 = vshrl.u32 %v51, 7
    %v53 = vsub.s32 %v50, %v52
    %v54 = vrot.slane %v47, %v53
    %v56 = vadd.f32 %v36, %v54
    %57 = vst [vmem:[#allocation7] sm:$0xf] %v56
    // Predicated region
    $region18: #{tpu_custom_call.1} parent=1 // pred_check
      _
    $region19: #{tpu_custom_call.1} parent=1 // pred_check_branch
      %59 = sbr.rel (0) target = $region21
    $region20: #{tpu_custom_call.1} parent=1 // pred_region
      %s61 = ssub.s32 64, 64
      %62 = vsyncadd [#allocation4], %s61
      %s64 = sshll.u32 [#allocation7], 4
      %s65 = int_to_ptr.vmem [resolvable:$true] %s64
      %67 = dma.vmem_to_hbm [thread:$0]  %s65, 64, %s2, [#allocation4]
    $region21: #{tpu_custom_call.1} parent=1 // pred_fallthru
      _
    // Predicated region
    $region22: #{tpu_custom_call.1} parent=1 // pred_check
      _
    $region23: #{tpu_custom_call.1} parent=1 // pred_check_branch
      %69 = sbr.rel (0) target = $region25
    $region24: #{tpu_custom_call.1} parent=1 // pred_region
      %70 = dma.done [#allocation4], 64
    $region25: #{tpu_custom_call.1} parent=1 // pred_fallthru
      _
    %71 = vsyncpa [#allocation3], 1
    %72 = vsyncpa [#allocation6], 1
    %73 = vsyncpa [#allocation4], 1

</llo_original>
